<compile_context>
chip_gen: v6e
topology: v6e:2x2x1
jax: 0.10.0
libtpu: 0.0.40
codegen_flags: <defaults>
</compile_context>

<pallas_src>
import jax
import jax.numpy as jnp
from jax import lax
from jax.experimental import pallas as pl
from jax.experimental.pallas import tpu as pltpu

# ------------------------- problem sizes (small, synthetic) -------------------------
N = 2          # batch
C_IN = 4       # channel_in
C_OUT = 8      # channel_out
L = 128        # sequence length (exactly lane-dense)
K = 15         # kernel_size
PAD = 7        # padding ("same")
KC = K * C_IN          # true contraction size = 60
KC_PAD = 64            # contraction padded to a multiple of 8 for the MXU
EPS = 1e-5             # BatchNorm eps
NEG_SLOPE = 0.1


def downsampling_kernel(x_ref, w_ref, gamma_ref, beta_ref, o_ref):
    """Fused Conv1d + BatchNorm1d(train-mode) + LeakyReLU, single MXU matmul.

    x_ref    : (N, C_in, L)       input (native layout; lane-fused in-kernel)
    w_ref    : (C_out, KC_PAD)    conv weight, tap-major (k*C_in + ci), zero-padded
    gamma_ref: (C_out, 1)         BN weight
    beta_ref : (C_out, 1)         BN bias
    o_ref    : (N, C_out, L)      output (native layout; per-batch full-tile stores)
    """
    # ---- fuse batch into the lane axis in-kernel: (N, C_in, L) -> (C_in, N*L)
    x2 = jnp.concatenate([x_ref[n] for n in range(N)], axis=1)   # (C_in, N*L) f32
    nl = x2.shape[1]                                             # static: N*L

    # Within-batch position of each fused-lane column (hoisted, computed once).
    col_idx = lax.broadcasted_iota(jnp.int32, x2.shape, 1)
    l_idx = col_idx % L

    # ---- build im2col as a register-resident value (no VMEM scratch round-trip).
    # Masked circular rolls handle the +/-7 halo; masks also zero lanes that the
    # roll wrapped across the batch boundary / array end.
    blocks = []
    for k in range(K):                                # 15 static taps
        s = k - PAD                                   # shift in [-7, 7]
        if s == 0:
            blk = x2
        else:
            rolled = pltpu.roll(x2, shift=(-s) % nl, axis=1)     # rolled[:, j] = x2[:, j+s] (circular)
            if s > 0:
                blk = jnp.where(l_idx < (L - s), rolled, 0.0)    # zero past the right edge
            else:
                blk = jnp.where(l_idx >= (-s), rolled, 0.0)      # zero before the left edge
        blocks.append(blk)
    # pad contraction 60 -> 64 with zero rows (matches zero-padded w_flat columns)
    blocks.append(jnp.zeros((KC_PAD - KC, nl), dtype=x2.dtype))
    col = jnp.concatenate(blocks, axis=0)             # (64, N*L), stays in vregs

    # ---- Conv1d as ONE MXU matmul (contraction = 64).
    # Conv bias intentionally omitted: exactly cancelled by train-mode BN mean subtraction.
    y = jnp.dot(w_ref[...], col, preferred_element_type=jnp.float32)   # (C_out, N*L)

    # ---- BatchNorm1d, training mode: per-channel stats over the fused (N, L) axis.
    # Two-pass variance (y is resident; avoids E[y^2]-mean^2 cancellation).
    inv_nl = 1.0 / nl
    mean = jnp.sum(y, axis=1, keepdims=True) * inv_nl                  # (C_out, 1)
    centered = y - mean
    var = jnp.sum(centered * centered, axis=1, keepdims=True) * inv_nl  # biased variance
    scale = lax.rsqrt(var + EPS) * gamma_ref[...]                      # (C_out, 1)
    y_bn = centered * scale + beta_ref[...]

    # ---- LeakyReLU(0.1), f32 epilogue.
    y_act = jnp.where(y_bn >= 0, y_bn, NEG_SLOPE * y_bn).astype(o_ref.dtype)

    # ---- un-fuse batch with per-batch full-(8,128)-tile stores (L == 128 lanes).
    for n in range(N):
        o_ref[n] = y_act[:, n * L:(n + 1) * L]

    # TODO(synk): PyTorch BatchNorm1d in training mode also updates running_mean /
    # running_var buffers as a side effect; only the forward output is produced here.


@jax.jit
def downsampling_layer(x, w_flat_pad, gamma, beta):
    """x: (N, C_in, L) f32; w_flat_pad: (C_out, KC_PAD) precomputed at init time.
    Returns (N, C_out, L) f32. No wrapper-side layout ops."""
    g2 = gamma.reshape(-1, 1)
    b2 = beta.reshape(-1, 1)

    return pl.pallas_call(
        downsampling_kernel,
        out_shape=jax.ShapeDtypeStruct((N, C_OUT, L), jnp.float32),
        in_specs=[
            pl.BlockSpec(x.shape, lambda: (0, 0, 0)),
            pl.BlockSpec(w_flat_pad.shape, lambda: (0, 0)),
            pl.BlockSpec(g2.shape, lambda: (0, 0)),
            pl.BlockSpec(b2.shape, lambda: (0, 0)),
        ],
        out_specs=pl.BlockSpec((N, C_OUT, L), lambda: (0, 0, 0)),
    )(x, w_flat_pad, g2, b2)


def _reference(x, w, b, gamma, beta):
    """Pure-JAX reference mirroring PyTorch semantics (Conv1d with bias +
    training-mode BatchNorm1d + LeakyReLU(0.1))."""
    y = lax.conv_general_dilated(
        x, w, window_strides=(1,), padding=[(PAD, PAD)],
        dimension_numbers=("NCH", "OIH", "NCH"))
    y = y + b[None, :, None]
    mean = jnp.mean(y, axis=(0, 2), keepdims=True)
    var = jnp.mean((y - mean) ** 2, axis=(0, 2), keepdims=True)
    y = (y - mean) / jnp.sqrt(var + EPS)
    y = y * gamma[None, :, None] + beta[None, :, None]
    return jnp.where(y >= 0, y, NEG_SLOPE * y)


if __name__ == "__main__":
    key = jax.random.PRNGKey(0)
    kx, kw, kb, kg, kbe = jax.random.split(key, 5)

    x = jax.random.normal(kx, (N, C_IN, L), dtype=jnp.float32)
    # Parameters with nn.Conv1d / nn.BatchNorm1d shapes.
    w = jax.random.normal(kw, (C_OUT, C_IN, K), dtype=jnp.float32) * 0.1    # Conv1d weight
    b = jax.random.normal(kb, (C_OUT,), dtype=jnp.float32) * 0.1            # Conv1d bias
    gamma = 1.0 + 0.1 * jax.random.normal(kg, (C_OUT,), dtype=jnp.float32)  # BN weight
    beta = 0.1 * jax.random.normal(kbe, (C_OUT,), dtype=jnp.float32)        # BN bias

    # Hoisted to param-init time: flatten weight tap-major to (C_out, K*C_in)
    # (w_flat[co, k*C_in + ci] = w[co, ci, k]) and zero-pad the contraction to 64
    # columns to match the in-kernel zero tap block. Conv bias `b` is not passed
    # to the kernel: exactly cancelled by training-mode BN mean subtraction.
    w_flat = jnp.transpose(w, (0, 2, 1)).reshape(C_OUT, KC)
    w_flat_pad = jnp.pad(w_flat, ((0, 0), (0, KC_PAD - KC)))

    out = downsampling_layer(x, w_flat_pad, gamma, beta)
    out = jax.block_until_ready(out)

    ref = _reference(x, w, b, gamma, beta)
    assert out.shape == (N, C_OUT, L)
    assert jnp.allclose(out, ref, atol=1e-4, rtol=1e-4), "mismatch vs reference"

    print("KERNEL_OK")
</pallas_src>

<mosaic_0001>
module attributes {stable_mosaic.version = 11 : i64} {
  func.func @downsampling_kernel(%arg0: memref<2x4x128xf32, #tpu.memory_space<vmem>>, %arg1: memref<8x64xf32, #tpu.memory_space<vmem>>, %arg2: memref<8x1xf32, #tpu.memory_space<vmem>>, %arg3: memref<8x1xf32, #tpu.memory_space<vmem>>, %arg4: memref<2x8x128xf32, #tpu.memory_space<vmem>>) attributes {dimension_semantics = [], scalar_prefetch = 0 : i64, scratch_operands = 0 : i64, tpu.core_type = #tpu.core_type<tc>} {
    %c0 = arith.constant 0 : index
    %c0_0 = arith.constant 0 : index
    %c0_1 = arith.constant 0 : index
    %0 = vector.load %arg0[%c0, %c0_0, %c0_1] : memref<2x4x128xf32, #tpu.memory_space<vmem>>, vector<1x4x128xf32>
    %1 = vector.shape_cast %0 : vector<1x4x128xf32> to vector<4x128xf32>
    %c1 = arith.constant 1 : index
    %c0_2 = arith.constant 0 : index
    %c0_3 = arith.constant 0 : index
    %2 = vector.load %arg0[%c1, %c0_2, %c0_3] : memref<2x4x128xf32, #tpu.memory_space<vmem>>, vector<1x4x128xf32>
    %3 = vector.shape_cast %2 : vector<1x4x128xf32> to vector<4x128xf32>
    %4 = tpu.concatenate %1, %3 in 1 : vector<4x128xf32>, vector<4x128xf32> -> vector<4x256xf32>
    %5 = tpu.iota {dimensions = array<i32: 1>} : vector<4x256xi32>
    %c128_i32 = arith.constant 128 : i32
    %c0_i32 = arith.constant 0 : i32
    %6 = arith.cmpi eq, %c128_i32, %c0_i32 : i32
    %c1_i32 = arith.constant 1 : i32
    %7 = arith.select %6, %c1_i32, %c128_i32 : i32
    %8 = vector.broadcast %7 : i32 to vector<4x256xi32>
    %9 = arith.remsi %5, %8 : vector<4x256xi32>
    %c0_i32_4 = arith.constant 0 : i32
    %10 = vector.broadcast %c0_i32_4 : i32 to vector<4x256xi32>
    %11 = arith.cmpi ne, %9, %10 : vector<4x256xi32>
    %c0_i32_5 = arith.constant 0 : i32
    %12 = vector.broadcast %c0_i32_5 : i32 to vector<4x256xi32>
    %13 = arith.cmpi slt, %9, %12 : vector<4x256xi32>
    %c0_i32_6 = arith.constant 0 : i32
    %14 = arith.cmpi slt, %7, %c0_i32_6 : i32
    %15 = vector.broadcast %14 : i1 to vector<4x256xi1>
    %16 = vector.broadcast %15 : vector<4x256xi1> to vector<4x256xi1>
    %17 = arith.xori %13, %16 : vector<4x256xi1>
    %18 = arith.andi %17, %11 : vector<4x256xi1>
    %19 = vector.broadcast %7 : i32 to vector<4x256xi32>
    %20 = arith.addi %9, %19 : vector<4x256xi32>
    %21 = arith.select %18, %20, %9 : vector<4x256xi1>, vector<4x256xi32>
    %c7_i32 = arith.constant 7 : i32
    %22 = tpu.dynamic_rotate %4 by %c7_i32 dim 1 : vector<4x256xf32>, i32 -> vector<4x256xf32>
    %c7_i32_7 = arith.constant 7 : i32
    %23 = vector.broadcast %c7_i32_7 : i32 to vector<4x256xi32>
    %24 = arith.cmpi sge, %21, %23 : vector<4x256xi32>
    %cst = arith.constant 0.000000e+00 : f32
    %25 = vector.broadcast %cst : f32 to vector<4x256xf32>
    %26 = arith.select %24, %22, %25 : vector<4x256xi1>, vector<4x256xf32>
    %c6_i32 = arith.constant 6 : i32
    %27 = tpu.dynamic_rotate %4 by %c6_i32 dim 1 : vector<4x256xf32>, i32 -> vector<4x256xf32>
    %c6_i32_8 = arith.constant 6 : i32
    %28 = vector.broadcast %c6_i32_8 : i32 to vector<4x256xi32>
    %29 = arith.cmpi sge, %21, %28 : vector<4x256xi32>
    %cst_9 = arith.constant 0.000000e+00 : f32
    %30 = vector.broadcast %cst_9 : f32 to vector<4x256xf32>
    %31 = arith.select %29, %27, %30 : vector<4x256xi1>, vector<4x256xf32>
    %c5_i32 = arith.constant 5 : i32
    %32 = tpu.dynamic_rotate %4 by %c5_i32 dim 1 : vector<4x256xf32>, i32 -> vector<4x256xf32>
    %c5_i32_10 = arith.constant 5 : i32
    %33 = vector.broadcast %c5_i32_10 : i32 to vector<4x256xi32>
    %34 = arith.cmpi sge, %21, %33 : vector<4x256xi32>
    %cst_11 = arith.constant 0.000000e+00 : f32
    %35 = vector.broadcast %cst_11 : f32 to vector<4x256xf32>
    %36 = arith.select %34, %32, %35 : vector<4x256xi1>, vector<4x256xf32>
    %c4_i32 = arith.constant 4 : i32
    %37 = tpu.dynamic_rotate %4 by %c4_i32 dim 1 : vector<4x256xf32>, i32 -> vector<4x256xf32>
    %c4_i32_12 = arith.constant 4 : i32
    %38 = vector.broadcast %c4_i32_12 : i32 to vector<4x256xi32>
    %39 = arith.cmpi sge, %21, %38 : vector<4x256xi32>
    %cst_13 = arith.constant 0.000000e+00 : f32
    %40 = vector.broadcast %cst_13 : f32 to vector<4x256xf32>
    %41 = arith.select %39, %37, %40 : vector<4x256xi1>, vector<4x256xf32>
    %c3_i32 = arith.constant 3 : i32
    %42 = tpu.dynamic_rotate %4 by %c3_i32 dim 1 : vector<4x256xf32>, i32 -> vector<4x256xf32>
    %c3_i32_14 = arith.constant 3 : i32
    %43 = vector.broadcast %c3_i32_14 : i32 to vector<4x256xi32>
    %44 = arith.cmpi sge, %21, %43 : vector<4x256xi32>
    %cst_15 = arith.constant 0.000000e+00 : f32
    %45 = vector.broadcast %cst_15 : f32 to vector<4x256xf32>
    %46 = arith.select %44, %42, %45 : vector<4x256xi1>, vector<4x256xf32>
    %c2_i32 = arith.constant 2 : i32
    %47 = tpu.dynamic_rotate %4 by %c2_i32 dim 1 : vector<4x256xf32>, i32 -> vector<4x256xf32>
    %c2_i32_16 = arith.constant 2 : i32
    %48 = vector.broadcast %c2_i32_16 : i32 to vector<4x256xi32>
    %49 = arith.cmpi sge, %21, %48 : vector<4x256xi32>
    %cst_17 = arith.constant 0.000000e+00 : f32
    %50 = vector.broadcast %cst_17 : f32 to vector<4x256xf32>
    %51 = arith.select %49, %47, %50 : vector<4x256xi1>, vector<4x256xf32>
    %c1_i32_18 = arith.constant 1 : i32
    %52 = tpu.dynamic_rotate %4 by %c1_i32_18 dim 1 : vector<4x256xf32>, i32 -> vector<4x256xf32>
    %c1_i32_19 = arith.constant 1 : i32
    %53 = vector.broadcast %c1_i32_19 : i32 to vector<4x256xi32>
    %54 = arith.cmpi sge, %21, %53 : vector<4x256xi32>
    %cst_20 = arith.constant 0.000000e+00 : f32
    %55 = vector.broadcast %cst_20 : f32 to vector<4x256xf32>
    %56 = arith.select %54, %52, %55 : vector<4x256xi1>, vector<4x256xf32>
    %c255_i32 = arith.constant 255 : i32
    %57 = tpu.dynamic_rotate %4 by %c255_i32 dim 1 : vector<4x256xf32>, i32 -> vector<4x256xf32>
    %c127_i32 = arith.constant 127 : i32
    %58 = vector.broadcast %c127_i32 : i32 to vector<4x256xi32>
    %59 = arith.cmpi slt, %21, %58 : vector<4x256xi32>
    %cst_21 = arith.constant 0.000000e+00 : f32
    %60 = vector.broadcast %cst_21 : f32 to vector<4x256xf32>
    %61 = arith.select %59, %57, %60 : vector<4x256xi1>, vector<4x256xf32>
    %c254_i32 = arith.constant 254 : i32
    %62 = tpu.dynamic_rotate %4 by %c254_i32 dim 1 : vector<4x256xf32>, i32 -> vector<4x256xf32>
    %c126_i32 = arith.constant 126 : i32
    %63 = vector.broadcast %c126_i32 : i32 to vector<4x256xi32>
    %64 = arith.cmpi slt, %21, %63 : vector<4x256xi32>
    %cst_22 = arith.constant 0.000000e+00 : f32
    %65 = vector.broadcast %cst_22 : f32 to vector<4x256xf32>
    %66 = arith.select %64, %62, %65 : vector<4x256xi1>, vector<4x256xf32>
    %c253_i32 = arith.constant 253 : i32
    %67 = tpu.dynamic_rotate %4 by %c253_i32 dim 1 : vector<4x256xf32>, i32 -> vector<4x256xf32>
    %c125_i32 = arith.constant 125 : i32
    %68 = vector.broadcast %c125_i32 : i32 to vector<4x256xi32>
    %69 = arith.cmpi slt, %21, %68 : vector<4x256xi32>
    %cst_23 = arith.constant 0.000000e+00 : f32
    %70 = vector.broadcast %cst_23 : f32 to vector<4x256xf32>
    %71 = arith.select %69, %67, %70 : vector<4x256xi1>, vector<4x256xf32>
    %c252_i32 = arith.constant 252 : i32
    %72 = tpu.dynamic_rotate %4 by %c252_i32 dim 1 : vector<4x256xf32>, i32 -> vector<4x256xf32>
    %c124_i32 = arith.constant 124 : i32
    %73 = vector.broadcast %c124_i32 : i32 to vector<4x256xi32>
    %74 = arith.cmpi slt, %21, %73 : vector<4x256xi32>
    %cst_24 = arith.constant 0.000000e+00 : f32
    %75 = vector.broadcast %cst_24 : f32 to vector<4x256xf32>
    %76 = arith.select %74, %72, %75 : vector<4x256xi1>, vector<4x256xf32>
    %c251_i32 = arith.constant 251 : i32
    %77 = tpu.dynamic_rotate %4 by %c251_i32 dim 1 : vector<4x256xf32>, i32 -> vector<4x256xf32>
    %c123_i32 = arith.constant 123 : i32
    %78 = vector.broadcast %c123_i32 : i32 to vector<4x256xi32>
    %79 = arith.cmpi slt, %21, %78 : vector<4x256xi32>
    %cst_25 = arith.constant 0.000000e+00 : f32
    %80 = vector.broadcast %cst_25 : f32 to vector<4x256xf32>
    %81 = arith.select %79, %77, %80 : vector<4x256xi1>, vector<4x256xf32>
    %c250_i32 = arith.constant 250 : i32
    %82 = tpu.dynamic_rotate %4 by %c250_i32 dim 1 : vector<4x256xf32>, i32 -> vector<4x256xf32>
    %c122_i32 = arith.constant 122 : i32
    %83 = vector.broadcast %c122_i32 : i32 to vector<4x256xi32>
    %84 = arith.cmpi slt, %21, %83 : vector<4x256xi32>
    %cst_26 = arith.constant 0.000000e+00 : f32
    %85 = vector.broadcast %cst_26 : f32 to vector<4x256xf32>
    %86 = arith.select %84, %82, %85 : vector<4x256xi1>, vector<4x256xf32>
    %c249_i32 = arith.constant 249 : i32
    %87 = tpu.dynamic_rotate %4 by %c249_i32 dim 1 : vector<4x256xf32>, i32 -> vector<4x256xf32>
    %c121_i32 = arith.constant 121 : i32
    %88 = vector.broadcast %c121_i32 : i32 to vector<4x256xi32>
    %89 = arith.cmpi slt, %21, %88 : vector<4x256xi32>
    %cst_27 = arith.constant 0.000000e+00 : f32
    %90 = vector.broadcast %cst_27 : f32 to vector<4x256xf32>
    %91 = arith.select %89, %87, %90 : vector<4x256xi1>, vector<4x256xf32>
    %cst_28 = arith.constant 0.000000e+00 : f32
    %92 = vector.broadcast %cst_28 : f32 to vector<4x256xf32>
    %93 = tpu.concatenate %26, %31, %36, %41, %46, %51, %56, %4, %61, %66, %71, %76, %81, %86, %91, %92 in 0 : vector<4x256xf32>, vector<4x256xf32>, vector<4x256xf32>, vector<4x256xf32>, vector<4x256xf32>, vector<4x256xf32>, vector<4x256xf32>, vector<4x256xf32>, vector<4x256xf32>, vector<4x256xf32>, vector<4x256xf32>, vector<4x256xf32>, vector<4x256xf32>, vector<4x256xf32>, vector<4x256xf32>, vector<4x256xf32> -> vector<64x256xf32>
    %c0_29 = arith.constant 0 : index
    %c0_30 = arith.constant 0 : index
    %94 = vector.load %arg1[%c0_29, %c0_30] : memref<8x64xf32, #tpu.memory_space<vmem>>, vector<8x64xf32>
    %cst_31 = arith.constant dense<0.000000e+00> : vector<8x256xf32>
    %95 = tpu.matmul %94, %93, %cst_31 {dimension_numbers = #tpu.dot_dimension_numbers<[1], [0], [0], [1], [0, 0, 1, 1], [], []>} : vector<8x64xf32>, vector<64x256xf32>, vector<8x256xf32> -> vector<8x256xf32>
    %cst_32 = arith.constant dense<0.000000e+00> : vector<8xf32>
    %96 = vector.multi_reduction <add>, %95, %cst_32 [1] : vector<8x256xf32> to vector<8xf32>
    %97 = vector.shape_cast %96 : vector<8xf32> to vector<8x1xf32>
    %cst_33 = arith.constant 3.906250e-03 : f32
    %98 = vector.broadcast %cst_33 : f32 to vector<8x1xf32>
    %99 = arith.mulf %97, %98 : vector<8x1xf32>
    %100 = vector.broadcast %99 : vector<8x1xf32> to vector<8x256xf32>
    %101 = arith.subf %95, %100 : vector<8x256xf32>
    %102 = arith.mulf %101, %101 : vector<8x256xf32>
    %cst_34 = arith.constant dense<0.000000e+00> : vector<8xf32>
    %103 = vector.multi_reduction <add>, %102, %cst_34 [1] : vector<8x256xf32> to vector<8xf32>
    %104 = vector.shape_cast %103 : vector<8xf32> to vector<8x1xf32>
    %cst_35 = arith.constant 3.906250e-03 : f32
    %105 = vector.broadcast %cst_35 : f32 to vector<8x1xf32>
    %106 = arith.mulf %104, %105 : vector<8x1xf32>
    %cst_36 = arith.constant 9.99999974E-6 : f32
    %107 = vector.broadcast %cst_36 : f32 to vector<8x1xf32>
    %108 = arith.addf %106, %107 : vector<8x1xf32>
    %109 = math.rsqrt %108 : vector<8x1xf32>
    %c0_37 = arith.constant 0 : index
    %c0_38 = arith.constant 0 : index
    %110 = vector.load %arg2[%c0_37, %c0_38] : memref<8x1xf32, #tpu.memory_space<vmem>>, vector<8x1xf32>
    %111 = arith.mulf %109, %110 : vector<8x1xf32>
    %112 = vector.broadcast %111 : vector<8x1xf32> to vector<8x256xf32>
    %113 = arith.mulf %101, %112 : vector<8x256xf32>
    %c0_39 = arith.constant 0 : index
    %c0_40 = arith.constant 0 : index
    %114 = vector.load %arg3[%c0_39, %c0_40] : memref<8x1xf32, #tpu.memory_space<vmem>>, vector<8x1xf32>
    %115 = vector.broadcast %114 : vector<8x1xf32> to vector<8x256xf32>
    %116 = arith.addf %113, %115 : vector<8x256xf32>
    %cst_41 = arith.constant 0.000000e+00 : f32
    %117 = vector.broadcast %cst_41 : f32 to vector<8x256xf32>
    %118 = arith.cmpf oge, %116, %117 : vector<8x256xf32>
    %cst_42 = arith.constant 1.000000e-01 : f32
    %119 = vector.broadcast %cst_42 : f32 to vector<8x256xf32>
    %120 = arith.mulf %119, %116 : vector<8x256xf32>
    %121 = arith.select %118, %116, %120 : vector<8x256xi1>, vector<8x256xf32>
    %122 = vector.extract_strided_slice %121 {offsets = [0, 0], sizes = [8, 128], strides = [1, 1]} : vector<8x256xf32> to vector<8x128xf32>
    %c0_43 = arith.constant 0 : index
    %c0_44 = arith.constant 0 : index
    %c0_45 = arith.constant 0 : index
    %123 = vector.load %arg4[%c0_43, %c0_44, %c0_45] : memref<2x8x128xf32, #tpu.memory_space<vmem>>, vector<1x8x128xf32>
    %124 = vector.shape_cast %123 : vector<1x8x128xf32> to vector<8x128xf32>
    %125 = vector.shape_cast %122 : vector<8x128xf32> to vector<1x8x128xf32>
    tpu.vector_store %arg4[%c0_43, %c0_44, %c0_45], %125 {strides = array<i32>} : memref<2x8x128xf32, #tpu.memory_space<vmem>>, vector<1x8x128xf32>,
    %126 = vector.extract_strided_slice %121 {offsets = [0, 128], sizes = [8, 128], strides = [1, 1]} : vector<8x256xf32> to vector<8x128xf32>
    %c1_46 = arith.constant 1 : index
    %c0_47 = arith.constant 0 : index
    %c0_48 = arith.constant 0 : index
    %127 = vector.load %arg4[%c1_46, %c0_47, %c0_48] : memref<2x8x128xf32, #tpu.memory_space<vmem>>, vector<1x8x128xf32>
    %128 = vector.shape_cast %127 : vector<1x8x128xf32> to vector<8x128xf32>
    %129 = vector.shape_cast %126 : vector<8x128xf32> to vector<1x8x128xf32>
    tpu.vector_store %arg4[%c1_46, %c0_47, %c0_48], %129 {strides = array<i32>} : memref<2x8x128xf32, #tpu.memory_space<vmem>>, vector<1x8x128xf32>,
    return
  }
}

</mosaic_0001>

<llo_original>
// kernel: downsampling_layer.1
$region0: #{downsampling_layer.1}
  #allocation0 [shape = 'u32[]', space=smem, size = 0x4, offset = 0x4, fixed_abs, tag = 'smem constant byte address 0x4 - core index']
  #allocation1 [shape = 'u32[144,128]{1,0:T(1,128)}', space=vmem, size = 0x12000, scoped, tag = 'internal scratch']
  %s0 = inlined_call_operand.vmem [shape: f32[2,4,128], index: 0, kind: input, shape index: {}]
  %s1 = inlined_call_operand.vmem [shape: f32[8,64], index: 1, kind: input, shape index: {}]
  %s2 = inlined_call_operand.vmem [shape: f32[8,1], index: 2, kind: input, shape index: {}]
  %s3 = inlined_call_operand.vmem [shape: f32[8,1], index: 3, kind: input, shape index: {}]
  %s4 = inlined_call_operand.hbm [shape: f32[2,8,128], index: 4, kind: output, shape index: {}]
  %s5 = sld [smem:[#allocation0]]
  $region26: #{downsampling_layer.1} parent=0
    _
  %s7 = ssub.s32 1, %s5
  %s8 = scalar_select 0, %s7, %s5
  $region1: #{downsampling_layer.1} parent=0
    #allocation2 [shape = 'u8[8192]{0}', space=vmem, size = 0x2000, scoped, tag = 'output window, operand 0, single buffered']
    #allocation3 [shape = 's32[1]{0}', space=sflag, size = 0x4, scoped, tag = 'scoped memory for downsampling_layer.1']
    %9 = vsyncpa [#allocation3], 0
    // Predicated region
    $region2: #{downsampling_layer.1} parent=1 // pred_check
      _
    $region3: #{downsampling_layer.1} parent=1 // pred_check_branch
      %11 = sbr.rel (0) target = $region5
    $region4: #{downsampling_layer.1} parent=1 // pred_region
      _
    $region5: #{downsampling_layer.1} parent=1 // pred_fallthru
      _
    // Predicated region
    $region6: #{downsampling_layer.1} parent=1 // pred_check
      _
    $region7: #{downsampling_layer.1} parent=1 // pred_check_branch
      %13 = sbr.rel (0) target = $region9
    $region8: #{downsampling_layer.1} parent=1 // pred_region
      _
    $region9: #{downsampling_layer.1} parent=1 // pred_fallthru
      _
    // Predicated region
    $region10: #{downsampling_layer.1} parent=1 // pred_check
      _
    $region11: #{downsampling_layer.1} parent=1 // pred_check_branch
      %15 = sbr.rel (0) target = $region13
    $region12: #{downsampling_layer.1} parent=1 // pred_region
      _
    $region13: #{downsampling_layer.1} parent=1 // pred_fallthru
      _
    // Predicated region
    $region14: #{downsampling_layer.1} parent=1 // pred_check
      _
    $region15: #{downsampling_layer.1} parent=1 // pred_check_branch
      %17 = sbr.rel (0) target = $region17
    $region16: #{downsampling_layer.1} parent=1 // pred_region
      _
    $region17: #{downsampling_layer.1} parent=1 // pred_fallthru
      _
    %v18 = vld [vmem:[%s0] sm:$0xf]
    %s19 = scalar_lea.vmem %s0, 4
    %v20 = vld [vmem:[%s19] sm:$0xf]
    %v21 = vlaneseq
    %v22 = vand.u32 %v21, 127
    %v23 = vadd.s32 %v22, 128
    %vm24 = vcmp.lt.s32.totalorder %v22, 0
    %v25 = vsub.s32 0, %v22
    %v26 = vsel %vm24, %v25, %v22
    %v27 = vshrl.u32 %v26, 7
    %v28 = vand.u32 %v26, 127
    %v29 = vsub.s32 0, %v28
    %v30 = vsel %vm24, %v29, %v28
    %vm31 = vcmp.lt.s32.totalorder %v23, 0
    %v32 = vsub.s32 0, %v23
    %v33 = vsel %vm31, %v32, %v23
    %v34 = vshrl.u32 %v33, 7
    %v35 = vand.u32 %v33, 127
    %v36 = vsub.s32 0, %v35
    %v37 = vsel %vm31, %v36, %v35
    %vm38 = vcmp.ne.s32.totalorder %v30, 0
    %vm39 = vcmp.ne.s32.totalorder %v37, 0
    %vm40 = vcmp.lt.s32.totalorder %v30, 0
    %vm41 = vcmp.lt.s32.totalorder %v37, 0
    %vm42 = vmand %vm40, %vm38
    %vm43 = vmand %vm41, %vm39
    %v44 = vadd.s32 %v30, 128
    %v45 = vadd.s32 %v37, 128
    %v46 = vsel %vm42, %v44, %v30
    %v47 = vsel %vm43, %v45, %v37
    %48 = vrot.lane.b32.xlu0 %v18, 7
    %v49 = vpop.permute.xlu0 %48
    %50 = vrot.lane.b32.xlu0 %v20, 7
    %v51 = vpop.permute.xlu0 %50
    %vm52 = vcmp.lt.s32.totalorder %v22, 7
    %v53 = vsel %vm52, %v49, %v51
    %v54 = vsel %vm52, %v51, %v49
    %vm55 = vcmp.ge.s32.totalorder %v46, 7
    %vm56 = vcmp.ge.s32.totalorder %v47, 7
    %v57 = vsel %vm55, %v54, 0.0
    %v58 = vsel %vm56, %v53, 0.0
    %59 = vrot.lane.b32.xlu0 %v18, 6
    %v60 = vpop.permute.xlu0 %59
    %61 = vrot.lane.b32.xlu0 %v20, 6
    %v62 = vpop.permute.xlu0 %61
    %vm63 = vcmp.lt.s32.totalorder %v22, 6
    %v64 = vsel %vm63, %v60, %v62
    %v65 = vsel %vm63, %v62, %v60
    %vm66 = vcmp.ge.s32.totalorder %v46, 6
    %vm67 = vcmp.ge.s32.totalorder %v47, 6
    %v68 = vsel %vm66, %v65, 0.0
    %v69 = vsel %vm67, %v64, 0.0
    %70 = vrot.lane.b32.xlu0 %v18, 5
    %v71 = vpop.permute.xlu0 %70
    %72 = vrot.lane.b32.xlu0 %v20, 5
    %v73 = vpop.permute.xlu0 %72
    %vm74 = vcmp.lt.s32.totalorder %v22, 5
    %v75 = vsel %vm74, %v71, %v73
    %v76 = vsel %vm74, %v73, %v71
    %vm77 = vcmp.ge.s32.totalorder %v46, 5
    %vm78 = vcmp.ge.s32.totalorder %v47, 5
    %v79 = vsel %vm77, %v76, 0.0
    %v80 = vsel %vm78, %v75, 0.0
    %81 = vrot.lane.b32.xlu0 %v18, 4
    %v82 = vpop.permute.xlu0 %81
    %83 = vrot.lane.b32.xlu0 %v20, 4
    %v84 = vpop.permute.xlu0 %83
    %vm85 = vcmp.lt.s32.totalorder %v22, 4
    %v86 = vsel %vm85, %v82, %v84
    %v87 = vsel %vm85, %v84, %v82
    %vm88 = vcmp.ge.s32.totalorder %v46, 4
    %vm89 = vcmp.ge.s32.totalorder %v47, 4
    %v90 = vsel %vm88, %v87, 0.0
    %v91 = vsel %vm89, %v86, 0.0
    %92 = vrot.lane.b32.xlu0 %v18, 3
    %v93 = vpop.permute.xlu0 %92
    %94 = vrot.lane.b32.xlu0 %v20, 3
    %v95 = vpop.permute.xlu0 %94
    %vm96 = vcmp.lt.s32.totalorder %v22, 3
    %v97 = vsel %vm96, %v93, %v95
    %v98 = vsel %vm96, %v95, %v93
    %vm99 = vcmp.ge.s32.totalorder %v46, 3
    %vm100 = vcmp.ge.s32.totalorder %v47, 3
    %v101 = vsel %vm99, %v98, 0.0
    %v102 = vsel %vm100, %v97, 0.0
    %103 = vrot.lane.b32.xlu0 %v18, 2
    %v104 = vpop.permute.xlu0 %103
    %105 = vrot.lane.b32.xlu0 %v20, 2
    %v106 = vpop.permute.xlu0 %105
    %vm107 = vcmp.lt.s32.totalorder %v22, 2
    %v108 = vsel %vm107, %v104, %v106
    %v109 = vsel %vm107, %v106, %v104
    %vm110 = vcmp.ge.s32.totalorder %v46, 2
    %vm111 = vcmp.ge.s32.totalorder %v47, 2
    %v112 = vsel %vm110, %v109, 0.0
    %v113 = vsel %vm111, %v108, 0.0
    %114 = vrot.lane.b32.xlu0 %v18, 1
    %v115 = vpop.permute.xlu0 %114
    %116 = vrot.lane.b32.xlu0 %v20, 1
    %v117 = vpop.permute.xlu0 %116
    %vm118 = vcmp.lt.s32.totalorder %v22, 1
    %v119 = vsel %vm118, %v115, %v117
    %v120 = vsel %vm118, %v117, %v115
    %vm121 = vcmp.ge.s32.totalorder %v46, 1
    %vm122 = vcmp.ge.s32.totalorder %v47, 1
    %v123 = vsel %vm121, %v120, 0.0
    %v124 = vsel %vm122, %v119, 0.0
    %125 = vrot.lane.b32.xlu0 %v18, 127
    %v126 = vpop.permute.xlu0 %125
    %127 = vrot.lane.b32.xlu0 %v20, 127
    %v128 = vpop.permute.xlu0 %127
    %vm129 = vcmp.lt.s32.totalorder %v22, 127
    %v130 = vsel %vm129, %v126, %v128
    %v131 = vsel %vm129, %v128, %v126
    %vm132 = vcmp.lt.s32.totalorder %v46, 127
    %vm133 = vcmp.lt.s32.totalorder %v47, 127
    %v134 = vsel %vm132, %v130, 0.0
    %v135 = vsel %vm133, %v131, 0.0
    %136 = vrot.lane.b32.xlu0 %v18, 126
    %v137 = vpop.permute.xlu0 %136
    %138 = vrot.lane.b32.xlu0 %v20, 126
    %v139 = vpop.permute.xlu0 %138
    %vm140 = vcmp.lt.s32.totalorder %v22, 126
    %v141 = vsel %vm140, %v137, %v139
    %v142 = vsel %vm140, %v139, %v137
    %vm143 = vcmp.lt.s32.totalorder %v46, 126
    %vm144 = vcmp.lt.s32.totalorder %v47, 126
    %v145 = vsel %vm143, %v141, 0.0
    %v146 = vsel %vm144, %v142, 0.0
    %147 = vrot.lane.b32.xlu0 %v18, 125
    %v148 = vpop.permute.xlu0 %147
    %149 = vrot.lane.b32.xlu0 %v20, 125
    %v150 = vpop.permute.xlu0 %149
    %vm151 = vcmp.lt.s32.totalorder %v22, 125
    %v152 = vsel %vm151, %v148, %v150
    %v153 = vsel %vm151, %v150, %v148
    %vm154 = vcmp.lt.s32.totalorder %v46, 125
    %vm155 = vcmp.lt.s32.totalorder %v47, 125
    %v156 = vsel %vm154, %v152, 0.0
    %v157 = vsel %vm155, %v153, 0.0
    %158 = vrot.lane.b32.xlu0 %v18, 124
    %v159 = vpop.permute.xlu0 %158
    %160 = vrot.lane.b32.xlu0 %v20, 124
    %v161 = vpop.permute.xlu0 %160
    %vm162 = vcmp.lt.s32.totalorder %v22, 124
    %v163 = vsel %vm162, %v159, %v161
    %v164 = vsel %vm162, %v161, %v159
    %vm165 = vcmp.lt.s32.totalorder %v46, 124
    %vm166 = vcmp.lt.s32.totalorder %v47, 124
    %v167 = vsel %vm165, %v163, 0.0
    %v168 = vsel %vm166, %v164, 0.0
    %169 = vrot.lane.b32.xlu0 %v18, 123
    %v170 = vpop.permute.xlu0 %169
    %171 = vrot.lane.b32.xlu0 %v20, 123
    %v172 = vpop.permute.xlu0 %171
    %vm173 = vcmp.lt.s32.totalorder %v22, 123
    %v174 = vsel %vm173, %v170, %v172
    %v175 = vsel %vm173, %v172, %v170
    %vm176 = vcmp.lt.s32.totalorder %v46, 123
    %vm177 = vcmp.lt.s32.totalorder %v47, 123
    %v178 = vsel %vm176, %v174, 0.0
    %v179 = vsel %vm177, %v175, 0.0
    %180 = vrot.lane.b32.xlu0 %v18, 122
    %v181 = vpop.permute.xlu0 %180
    %182 = vrot.lane.b32.xlu0 %v20, 122
    %v183 = vpop.permute.xlu0 %182
    %vm184 = vcmp.lt.s32.totalorder %v22, 122
    %v185 = vsel %vm184, %v181, %v183
    %v186 = vsel %vm184, %v183, %v181
    %vm187 = vcmp.lt.s32.totalorder %v46, 122
    %vm188 = vcmp.lt.s32.totalorder %v47, 122
    %v189 = vsel %vm187, %v185, 0.0
    %v190 = vsel %vm188, %v186, 0.0
    %191 = vrot.lane.b32.xlu0 %v18, 121
    %v192 = vpop.permute.xlu0 %191
    %193 = vrot.lane.b32.xlu0 %v20, 121
    %v194 = vpop.permute.xlu0 %193
    %vm195 = vcmp.lt.s32.totalorder %v22, 121
    %v196 = vsel %vm195, %v192, %v194
    %v197 = vsel %vm195, %v194, %v192
    %vm198 = vcmp.lt.s32.totalorder %v46, 121
    %vm199 = vcmp.lt.s32.totalorder %v47, 121
    %v200 = vsel %vm198, %v196, 0.0
    %v201 = vsel %vm199, %v197, 0.0
    %v204 = vrot.slane %v68, 4
    %v205 = vrot.slane %v69, 4
    %v210 = vrot.slane %v90, 4
    %v211 = vrot.slane %v91, 4
    %v216 = vrot.slane %v112, 4
    %v217 = vrot.slane %v113, 4
    %v222 = vrot.slane %v18, 4
    %v223 = vrot.slane %v20, 4
    %v228 = vrot.slane %v145, 4
    %v229 = vrot.slane %v146, 4
    %v234 = vrot.slane %v167, 4
    %v235 = vrot.slane %v168, 4
    %v240 = vrot.slane %v189, 4
    %v241 = vrot.slane %v190, 4
    %vm244 = vcmask 1043456
    %v245 = vsel %vm244, %v57, %v204
    %v246 = vsel %vm244, %v58, %v205
    %v247 = vsel %vm244, %v79, %v210
    %v248 = vsel %vm244, %v80, %v211
    %v249 = vsel %vm244, %v101, %v216
    %v250 = vsel %vm244, %v102, %v217
    %v251 = vsel %vm244, %v123, %v222
    %v252 = vsel %vm244, %v124, %v223
    %v253 = vsel %vm244, %v134, %v228
    %v254 = vsel %vm244, %v135, %v229
    %v255 = vsel %vm244, %v156, %v234
    %v256 = vsel %vm244, %v157, %v235
    %v257 = vsel %vm244, %v178, %v240
    %v258 = vsel %vm244, %v179, %v241
    %v259 = vsel %vm244, %v200, 0.0
    %v260 = vsel %vm244, %v201, 0.0
    %v261 = vld [vmem:[%s1] sm:$0xff]
    %vm262 = vcmask 523264
    %v264 = vsel %vm262, %v261, 0
    %266 = vmatprep.subr.mxu0 0.0
    %267 = vmatpush1.msra.mxu0 0.0
    %268 = vmatprep.subr.mxu0 0.0
    %269 = vmatpush1.msra.mxu0 0.0
    %270 = vmatprep.subr.mxu0 0.0
    %271 = vmatpush1.msra.mxu0 0.0
    %272 = vmatprep.subr.mxu0 0.0
    %273 = vmatpush1.msra.mxu0 0.0
    %274 = vmatprep.subr.mxu0 0.0
    %275 = vmatpush1.msra.mxu0 0.0
    %276 = vmatprep.subr.mxu0 0.0
    %277 = vmatpush1.msra.mxu0 0.0
    %278 = vmatprep.subr.mxu0 0.0
    %279 = vmatpush1.msra.mxu0 0.0
    %280 = vmatprep.subr.mxu0 0.0
    %281 = vmatpush1.msra.mxu0 0.0
    %282 = vmatprep.subr.mxu0 %v260
    %283 = vmatpush1.msra.mxu0 %v259
    %284 = vmatprep.subr.mxu0 %v258
    %285 = vmatpush1.msra.mxu0 %v257
    %286 = vmatprep.subr.mxu0 %v256
    %287 = vmatpush1.msra.mxu0 %v255
    %288 = vmatprep.subr.mxu0 %v254
    %289 = vmatpush1.msra.mxu0 %v253
    %290 = vmatprep.subr.mxu0 %v252
    %291 = vmatpush1.msra.mxu0 %v251
    %292 = vmatprep.subr.mxu0 %v250
    %293 = vmatpush1.msra.mxu0 %v249
    %294 = vmatprep.subr.mxu0 %v248
    %295 = vmatpush1.msra.mxu0 %v247
    %296 = vmatprep.subr.mxu0 %v246
    %297 = vmatpush1.msra.mxu0 %v245
    %298 = vmatprep.subr.mxu0 0.0
    %299 = vmatpush2.msra.mxu0 0.0
    %300 = vmatprep.subr.mxu0 0.0
    %301 = vmatpush2.msra.mxu0 0.0
    %302 = vmatprep.subr.mxu0 0.0
    %303 = vmatpush2.msra.mxu0 0.0
    %304 = vmatprep.subr.mxu0 0.0
    %305 = vmatpush2.msra.mxu0 0.0
    %306 = vmatprep.subr.mxu0 0.0
    %307 = vmatpush2.msra.mxu0 0.0
    %308 = vmatprep.subr.mxu0 0.0
    %309 = vmatpush2.msra.mxu0 0.0
    %310 = vmatprep.subr.mxu0 0.0
    %311 = vmatpush2.msra.mxu0 0.0
    %312 = vmatprep.subr.mxu0 0.0
    %313 = vmatpush2.msra.mxu0 0.0
    %314 = vmatprep.subr.mxu0 0.0
    %315 = vmatpush2.msra.mxu0 0.0
    %316 = vmatprep.subr.mxu0 0.0
    %317 = vmatpush2.msra.mxu0 0.0
    %318 = vmatprep.subr.mxu0 0.0
    %319 = vmatpush2.msra.mxu0 0.0
    %320 = vmatprep.subr.mxu0 0.0
    %321 = vmatpush2.msra.mxu0 0.0
    %322 = vmatprep.subr.mxu0 0.0
    %323 = vmatpush2.msra.mxu0 0.0
    %324 = vmatprep.subr.mxu0 0.0
    %325 = vmatpush2.msra.mxu0 0.0
    %326 = vmatprep.subr.mxu0 0.0
    %327 = vmatpush2.msra.mxu0 0.0
    %328 = vmatprep.subr.mxu0 0.0
    %329 = vmatpush2.msra.mxu0 0.0
    %330 = vmatprep.mubr.f32.mxu0 0.0
    %331 = vmatmul.mubr.f32.gmra.mxu0 %v264
    %v332 = vpop.f32.mrf.mxu0
    %v333 = vadd.f32 0.0, %v332
    %v334 = vpop.f32.mrf.mxu0
    %v335 = vadd.f32 0.0, %v334
    %336 = vdwg.mxu0
    %v337 = vadd.f32 %v333, %v335
    %338 = vadd.xlane.f32.xlu0 %v337
    %v339 = vpop.xlane.xlu0 %338
    %v340 = vmul.f32 %v339, 0.00390625
    %v341 = vsub.f32 %v333, %v340
    %v342 = vsub.f32 %v335, %v340
    %v343 = vmul.f32 %v341, %v341
    %v344 = vmul.f32 %v342, %v342
    %v345 = vadd.f32 %v343, %v344
    %346 = vadd.xlane.f32.xlu0 %v345
    %v347 = vpop.xlane.xlu0 %346
    %v348 = vmul.f32 %v347, 0.00390625
    %v349 = vadd.f32 %v348, 1e-05
    %v350 = vrsqrt.pop %v349
    %v351 = vld [vmem:[%s2] sm:$0xff]
    %v352 = vmul.f32 %v350, %v351
    %354 = vset.pattern.permute.xlu0 0
    %355 = vperm.xlu0 %354, %v352
    %v356 = vpop.permute.xlu0 %355
    %v358 = vmul.f32 %v341, %v356
    %v359 = vmul.f32 %v342, %v356
    %v360 = vld [vmem:[%s3] sm:$0xff]
    %362 = vset.pattern.permute.xlu0 0
    %363 = vperm.xlu0 %362, %v360
    %v364 = vpop.permute.xlu0 %363
    %v366 = vadd.f32 %v358, %v364
    %v367 = vadd.f32 %v359, %v364
    %vm368 = vcmp.ge.f32.partialorder %v366, 0.0
    %vm369 = vcmp.ge.f32.partialorder %v367, 0.0
    %v370 = vmul.f32 %v366, 0.1
    %v371 = vmul.f32 %v367, 0.1
    %v372 = vsel %vm368, %v366, %v370
    %v373 = vsel %vm369, %v367, %v371
    %374 = vst [vmem:[#allocation2] sm:$0xff] %v372
    %s375 = scalar_lea.vmem [#allocation2], 8
    %376 = vst [vmem:[%s375] sm:$0xff] %v373
    // Predicated region
    $region18: #{downsampling_layer.1} parent=1 // pred_check
      _
    $region19: #{downsampling_layer.1} parent=1 // pred_check_branch
      %378 = sbr.rel (0) target = $region21
    $region20: #{downsampling_layer.1} parent=1 // pred_region
      %s380 = ssub.s32 256, 256
      %381 = vsyncadd [#allocation3], %s380
      %s382 = sshll.u32 [#allocation2], 4
      %s383 = int_to_ptr.vmem [resolvable:$true] %s382
      %388 = dma.vmem_to_hbm [thread:$0]  %s383, 256, %s4, [#allocation3], 128, 128, 8
    $region21: #{downsampling_layer.1} parent=1 // pred_fallthru
      _
    // Predicated region
    $region22: #{downsampling_layer.1} parent=1 // pred_check
      _
    $region23: #{downsampling_layer.1} parent=1 // pred_check_branch
      %390 = sbr.rel (0) target = $region25
    $region24: #{downsampling_layer.1} parent=1 // pred_region
      %391 = dma.done [#allocation3], 256
    $region25: #{downsampling_layer.1} parent=1 // pred_fallthru
      _
    %392 = vsyncpa [#allocation3], 1

</llo_original>
